<compile_context>
chip_gen: v5e
topology: v5e:2x2
jax: 0.10.0
libtpu: 0.0.40
codegen_flags: <defaults>
</compile_context>

<pallas_src>
import jax
import jax.numpy as jnp
from jax.experimental import pallas as pl
from jax.experimental.pallas import tpu as pltpu


# ---------------------------------------------------------------------------
# Problem constants for the concrete inner CNN.
# ---------------------------------------------------------------------------
CIN, CMID, NCLS = 4, 8, 10
H = W = 16
KH = KW = 3
HP = WP = H + 2                 # 18x18 conv1 output grid (1-px halo = conv2 SAME pad)
NGRID = HP * WP                 # 324 flattened grid positions
SP_OUT = 384                    # conv2 / pooling lane width  (>= NGRID, multiple of 128)
SP_IN = 512                     # conv1 lane width (>= SP_OUT + max tap shift, mult of 128)
K1 = KH * KW * CIN              # 36  conv1 im2col contraction
K2 = KH * KW * CMID             # 72  conv2 in-kernel im2col contraction
LANE = 128                      # lane-dense logits row; first NCLS lanes are real
SHIFTS = tuple(dh * WP + dw for dh in range(KH) for dw in range(KW))   # 0..38
assert SP_OUT + max(SHIFTS) <= SP_IN

# net(concat([x, x])) == concat([net(x), net(x)]) ONLY because this inner
# network has no noise layers; set False for faithful "run both copies".
DEDUP_DUPLICATED_BATCH = True


# ---------------------------------------------------------------------------
# Fused Pallas kernel: conv1 -> conv2 -> GAP -> linear, spatial on lanes.
# ---------------------------------------------------------------------------
def fused_cnn_kernel(a_ref, m1_ref, mp_ref, w1_ref, b1_ref, w2_ref, b2_ref,
                     w3_ref, b3_ref, out_ref):
    bpp = a_ref.shape[0]                  # images handled by this program (static)
    rows = []
    for b in range(bpp):                  # static unroll over the block's images
        # ---- conv1: single matmul against host-built im2col (K=36, N=512) ----
        h1 = jnp.dot(w1_ref[...], a_ref[b],
                     preferred_element_type=jnp.float32)          # (CMID, SP_IN)
        # bias + ReLU + interior mask (zeros the halo ring and the lane padding)
        h1 = jnp.maximum(h1 + b1_ref[...], 0.0) * m1_ref[...]

        # ---- conv2: 9 lane-shifted views concatenated along K -> one matmul --
        # view s = (dh*WP + dw): h1[:, s + q] is the tap value needed at output
        # flat position q = i*WP + j (valid only for i, j < 16; masked at pool).
        big = jnp.concatenate([h1[:, s:s + SP_OUT] for s in SHIFTS], axis=0)
        h2 = jnp.dot(w2_ref[...], big,
                     preferred_element_type=jnp.float32)          # (CMID, SP_OUT)
        h2 = jnp.maximum(h2 + b2_ref[...], 0.0)

        # ---- global average pool (1/HW folded into the pooling mask) ---------
        pooled = jnp.sum(h2 * mp_ref[...], axis=1, keepdims=True)  # (CMID, 1)

        # ---- linear head, lane-dense (zero-padded to 128 lanes) --------------
        rows.append(jnp.sum(pooled * w3_ref[...], axis=0, keepdims=True))  # (1, LANE)

    logits = rows[0] if bpp == 1 else jnp.concatenate(rows, axis=0)
    out_ref[:, 0, :] = logits + b3_ref[...]


def fused_cnn_forward(a, mask1, pool_mask, kp, images_per_program):
    """a: (B, 36, 512) lane-dense im2col; returns (B, NCLS) logits."""
    bk = a.shape[0]
    bpp = images_per_program
    assert bk % bpp == 0
    out = pl.pallas_call(
        fused_cnn_kernel,
        out_shape=jax.ShapeDtypeStruct((bk, 1, LANE), jnp.float32),
        grid_spec=pltpu.PrefetchScalarGridSpec(
            num_scalar_prefetch=0,
            grid=(bk // bpp,),
            in_specs=[
                pl.BlockSpec((bpp, K1, SP_IN), lambda g: (g, 0, 0)),
                pl.BlockSpec((1, SP_IN), lambda g: (0, 0)),
                pl.BlockSpec((1, SP_OUT), lambda g: (0, 0)),
                pl.BlockSpec((CMID, K1), lambda g: (0, 0)),
                pl.BlockSpec((CMID, 1), lambda g: (0, 0)),
                pl.BlockSpec((CMID, K2), lambda g: (0, 0)),
                pl.BlockSpec((CMID, 1), lambda g: (0, 0)),
                pl.BlockSpec((CMID, LANE), lambda g: (0, 0)),
                pl.BlockSpec((1, LANE), lambda g: (0, 0)),
            ],
            out_specs=pl.BlockSpec((bpp, 1, LANE), lambda g: (g, 0, 0)),
        ),
        compiler_params=pltpu.CompilerParams(
            dimension_semantics=("parallel",)),
    )(a, mask1, pool_mask, kp["w1"], kp["b1"], kp["w2"], kp["b2"],
      kp["w3"], kp["b3"])
    return out[:, 0, :NCLS]


# ---------------------------------------------------------------------------
# Host-side prep: grid choice, weight packing, im2col, masks.
# ---------------------------------------------------------------------------
def default_images_per_program(batch):
    """Collapse the grid on single-TC chips (v5e/v6e); one image per program on
    multi-TensorCore chips (v7x) so grid=(B,) shards across cores."""
    try:
        kind = jax.devices()[0].device_kind.lower()
    except Exception:
        kind = ""
    return 1 if "v7" in kind else batch


def pack_params(params):
    """PyTorch OIHW conv weights -> (Cout, 9*Cin); head padded to 128 lanes."""
    w1 = jnp.transpose(params["w1"], (0, 2, 3, 1)).reshape(CMID, K1)
    w2 = jnp.transpose(params["w2"], (0, 2, 3, 1)).reshape(CMID, K2)
    w3 = jnp.zeros((CMID, LANE), jnp.float32).at[:, :NCLS].set(params["w3"])
    b3 = jnp.zeros((1, LANE), jnp.float32).at[:, :NCLS].set(params["b3"])
    return {"w1": w1, "b1": params["b1"].reshape(CMID, 1),
            "w2": w2, "b2": params["b2"].reshape(CMID, 1),
            "w3": w3, "b3": b3}


def build_im2col(x_nchw):
    """(B, CIN, H, W) -> lane-dense (B, 36, 512) conv1 im2col on the 18x18 grid."""
    b = x_nchw.shape[0]
    x = jnp.transpose(x_nchw, (0, 2, 3, 1))                      # NHWC (B,16,16,4)
    xp = jnp.pad(x, ((0, 0), (2, 2), (2, 2), (0, 0)))            # (B,20,20,4)
    taps = [xp[:, dh:dh + HP, dw:dw + WP, :]                     # (B,18,18,4)
            for dh in range(KH) for dw in range(KW)]
    a = jnp.stack(taps, axis=1)                                  # (B,9,18,18,4)
    a = jnp.transpose(a, (0, 1, 4, 2, 3)).reshape(b, K1, NGRID)  # (B,36,324)
    return jnp.pad(a, ((0, 0), (0, 0), (0, SP_IN - NGRID)))      # (B,36,512)


def build_masks():
    """Lane-dense f32 masks: conv1 interior mask and pooling mask (with 1/HW)."""
    p = jnp.arange(SP_IN)
    r, c = p // WP, p % WP
    interior = (r >= 1) & (r <= H) & (c >= 1) & (c <= W) & (p < NGRID)
    mask1 = interior.astype(jnp.float32).reshape(1, SP_IN)

    q = jnp.arange(SP_OUT)
    rq, cq = q // WP, q % WP
    valid = (rq < H) & (cq < W) & (q < NGRID)
    pool_mask = (valid.astype(jnp.float32) / float(H * W)).reshape(1, SP_OUT)
    return mask1, pool_mask


def perturb_forw_net_forward(params, x_nchw, training=True,
                             images_per_program=None,
                             dedup=DEDUP_DUPLICATED_BATCH):
    """PerturbForwNet.forward: duplicate batch in training mode, run inner net."""
    # The inner network here is deterministic, so with dedup=True we run the
    # kernel once and duplicate the logits (halves compute/DMA).  dedup=False
    # runs both copies through the kernel, matching PyTorch literally.
    # TODO(synk): once noise layers exist, per-copy noise must be sampled
    # inside the kernel and dedup must be disabled.
    if training and not dedup:
        x_nchw = jnp.concatenate([x_nchw, x_nchw], axis=0)

    kp = pack_params(params)
    a = build_im2col(x_nchw)
    mask1, pool_mask = build_masks()
    if images_per_program is None:
        images_per_program = default_images_per_program(a.shape[0])
    logits = fused_cnn_forward(a, mask1, pool_mask, kp, images_per_program)

    if training and dedup:
        logits = jnp.concatenate([logits, logits], axis=0)
    return logits

# TODO(synk): apply_grad_scaling_to_noise_layers / get_network_noise_normalizers /
# compare_BPangles / train_step / test_step are host-side noise-layer
# bookkeeping (no forward-pass compute); not expressed as kernels.


# ---------------------------------------------------------------------------
# Deterministic parameter init + pure-JAX reference check.
# ---------------------------------------------------------------------------
def init_params(key, cin=CIN, cmid=CMID, n_cls=NCLS):
    ks = jax.random.split(key, 6)

    def u(k, shape, fan_in):
        bound = 1.0 / jnp.sqrt(float(fan_in))
        return jax.random.uniform(k, shape, jnp.float32, -bound, bound)

    return {
        "w1": u(ks[0], (cmid, cin, 3, 3), cin * 9),
        "b1": u(ks[1], (cmid,), cin * 9),
        "w2": u(ks[2], (cmid, cmid, 3, 3), cmid * 9),
        "b2": u(ks[3], (cmid,), cmid * 9),
        "w3": u(ks[4], (cmid, n_cls), cmid),
        "b3": u(ks[5], (n_cls,), cmid),
    }


def reference_forward(params, x_nchw, training=True):
    if training:
        x_nchw = jnp.concatenate([x_nchw, x_nchw], axis=0)
    dn = ("NCHW", "OIHW", "NCHW")
    h = jax.lax.conv_general_dilated(x_nchw, params["w1"], (1, 1), "SAME",
                                     dimension_numbers=dn)
    h = jnp.maximum(h + params["b1"][None, :, None, None], 0.0)
    h = jax.lax.conv_general_dilated(h, params["w2"], (1, 1), "SAME",
                                     dimension_numbers=dn)
    h = jnp.maximum(h + params["b2"][None, :, None, None], 0.0)
    pooled = jnp.mean(h, axis=(2, 3))
    return pooled @ params["w3"] + params["b3"]


if __name__ == "__main__":
    key = jax.random.PRNGKey(0)
    pkey, xkey = jax.random.split(key)
    params = init_params(pkey)
    x = jax.random.normal(xkey, (2, CIN, H, W), dtype=jnp.float32)

    fwd = jax.jit(lambda p, xx: perturb_forw_net_forward(p, xx, training=True))
    out = jax.block_until_ready(fwd(params, x))
    assert out.shape == (4, NCLS), out.shape

    ref = reference_forward(params, x, training=True)
    assert jnp.allclose(out, ref, atol=1e-4, rtol=1e-4), "mismatch vs reference"

    print("KERNEL_OK")
</pallas_src>

<mosaic_0001>
module attributes {stable_mosaic.version = 11 : i64} {
  func.func @fused_cnn_kernel(%arg0: i32, %arg1: memref<2x36x512xf32, #tpu.memory_space<vmem>>, %arg2: memref<1x512xf32, #tpu.memory_space<vmem>>, %arg3: memref<1x384xf32, #tpu.memory_space<vmem>>, %arg4: memref<8x36xf32, #tpu.memory_space<vmem>>, %arg5: memref<8x1xf32, #tpu.memory_space<vmem>>, %arg6: memref<8x72xf32, #tpu.memory_space<vmem>>, %arg7: memref<8x1xf32, #tpu.memory_space<vmem>>, %arg8: memref<8x128xf32, #tpu.memory_space<vmem>>, %arg9: memref<1x128xf32, #tpu.memory_space<vmem>>, %arg10: memref<2x1x128xf32, #tpu.memory_space<vmem>>) attributes {dimension_semantics = [#tpu.dimension_semantics<parallel>], iteration_bounds = array<i64: 1>, scalar_prefetch = 0 : i64, scratch_operands = 0 : i64, tpu.core_type = #tpu.core_type<tc>, window_params = [{transform_indices = @transform_0, window_bounds = array<i64: 2, 36, 512>}, {pipeline_mode = #tpu.pipeline_mode<synchronous>, transform_indices = @transform_1, window_bounds = array<i64: 1, 512>}, {pipeline_mode = #tpu.pipeline_mode<synchronous>, transform_indices = @transform_2, window_bounds = array<i64: 1, 384>}, {pipeline_mode = #tpu.pipeline_mode<synchronous>, transform_indices = @transform_3, window_bounds = array<i64: 8, 36>}, {pipeline_mode = #tpu.pipeline_mode<synchronous>, transform_indices = @transform_4, window_bounds = array<i64: 8, 1>}, {pipeline_mode = #tpu.pipeline_mode<synchronous>, transform_indices = @transform_5, window_bounds = array<i64: 8, 72>}, {pipeline_mode = #tpu.pipeline_mode<synchronous>, transform_indices = @transform_6, window_bounds = array<i64: 8, 1>}, {pipeline_mode = #tpu.pipeline_mode<synchronous>, transform_indices = @transform_7, window_bounds = array<i64: 8, 128>}, {pipeline_mode = #tpu.pipeline_mode<synchronous>, transform_indices = @transform_8, window_bounds = array<i64: 1, 128>}, {transform_indices = @transform_9, window_bounds = array<i64: 2, 1, 128>}]} {
    %c0 = arith.constant 0 : index
    %c0_0 = arith.constant 0 : index
    %0 = vector.load %arg4[%c0, %c0_0] : memref<8x36xf32, #tpu.memory_space<vmem>>, vector<8x36xf32>
    %c0_1 = arith.constant 0 : index
    %c0_2 = arith.constant 0 : index
    %c0_3 = arith.constant 0 : index
    %1 = vector.load %arg1[%c0_1, %c0_2, %c0_3] : memref<2x36x512xf32, #tpu.memory_space<vmem>>, vector<1x36x512xf32>
    %2 = vector.shape_cast %1 : vector<1x36x512xf32> to vector<36x512xf32>
    %cst = arith.constant dense<0.000000e+00> : vector<8x512xf32>
    %3 = tpu.matmul %0, %2, %cst {dimension_numbers = #tpu.dot_dimension_numbers<[1], [0], [0], [1], [0, 0, 1, 1], [], []>} : vector<8x36xf32>, vector<36x512xf32>, vector<8x512xf32> -> vector<8x512xf32>
    %c0_4 = arith.constant 0 : index
    %c0_5 = arith.constant 0 : index
    %4 = vector.load %arg5[%c0_4, %c0_5] : memref<8x1xf32, #tpu.memory_space<vmem>>, vector<8x1xf32>
    %5 = vector.broadcast %4 : vector<8x1xf32> to vector<8x512xf32>
    %6 = arith.addf %3, %5 : vector<8x512xf32>
    %cst_6 = arith.constant 0.000000e+00 : f32
    %7 = vector.broadcast %cst_6 : f32 to vector<8x512xf32>
    %8 = arith.maximumf %6, %7 : vector<8x512xf32>
    %c0_7 = arith.constant 0 : index
    %c0_8 = arith.constant 0 : index
    %9 = vector.load %arg2[%c0_7, %c0_8] : memref<1x512xf32, #tpu.memory_space<vmem>>, vector<1x512xf32>
    %10 = vector.broadcast %9 : vector<1x512xf32> to vector<8x512xf32>
    %11 = arith.mulf %8, %10 : vector<8x512xf32>
    %12 = vector.extract_strided_slice %11 {offsets = [0, 0], sizes = [8, 384], strides = [1, 1]} : vector<8x512xf32> to vector<8x384xf32>
    %13 = vector.extract_strided_slice %11 {offsets = [0, 1], sizes = [8, 384], strides = [1, 1]} : vector<8x512xf32> to vector<8x384xf32>
    %14 = vector.extract_strided_slice %11 {offsets = [0, 2], sizes = [8, 384], strides = [1, 1]} : vector<8x512xf32> to vector<8x384xf32>
    %15 = vector.extract_strided_slice %11 {offsets = [0, 18], sizes = [8, 384], strides = [1, 1]} : vector<8x512xf32> to vector<8x384xf32>
    %16 = vector.extract_strided_slice %11 {offsets = [0, 19], sizes = [8, 384], strides = [1, 1]} : vector<8x512xf32> to vector<8x384xf32>
    %17 = vector.extract_strided_slice %11 {offsets = [0, 20], sizes = [8, 384], strides = [1, 1]} : vector<8x512xf32> to vector<8x384xf32>
    %18 = vector.extract_strided_slice %11 {offsets = [0, 36], sizes = [8, 384], strides = [1, 1]} : vector<8x512xf32> to vector<8x384xf32>
    %19 = vector.extract_strided_slice %11 {offsets = [0, 37], sizes = [8, 384], strides = [1, 1]} : vector<8x512xf32> to vector<8x384xf32>
    %20 = vector.extract_strided_slice %11 {offsets = [0, 38], sizes = [8, 384], strides = [1, 1]} : vector<8x512xf32> to vector<8x384xf32>
    %21 = tpu.concatenate %12, %13, %14, %15, %16, %17, %18, %19, %20 in 0 : vector<8x384xf32>, vector<8x384xf32>, vector<8x384xf32>, vector<8x384xf32>, vector<8x384xf32>, vector<8x384xf32>, vector<8x384xf32>, vector<8x384xf32>, vector<8x384xf32> -> vector<72x384xf32>
    %c0_9 = arith.constant 0 : index
    %c0_10 = arith.constant 0 : index
    %22 = vector.load %arg6[%c0_9, %c0_10] : memref<8x72xf32, #tpu.memory_space<vmem>>, vector<8x72xf32>
    %cst_11 = arith.constant dense<0.000000e+00> : vector<8x384xf32>
    %23 = tpu.matmul %22, %21, %cst_11 {dimension_numbers = #tpu.dot_dimension_numbers<[1], [0], [0], [1], [0, 0, 1, 1], [], []>} : vector<8x72xf32>, vector<72x384xf32>, vector<8x384xf32> -> vector<8x384xf32>
    %c0_12 = arith.constant 0 : index
    %c0_13 = arith.constant 0 : index
    %24 = vector.load %arg7[%c0_12, %c0_13] : memref<8x1xf32, #tpu.memory_space<vmem>>, vector<8x1xf32>
    %25 = vector.broadcast %24 : vector<8x1xf32> to vector<8x384xf32>
    %26 = arith.addf %23, %25 : vector<8x384xf32>
    %cst_14 = arith.constant 0.000000e+00 : f32
    %27 = vector.broadcast %cst_14 : f32 to vector<8x384xf32>
    %28 = arith.maximumf %26, %27 : vector<8x384xf32>
    %c0_15 = arith.constant 0 : index
    %c0_16 = arith.constant 0 : index
    %29 = vector.load %arg3[%c0_15, %c0_16] : memref<1x384xf32, #tpu.memory_space<vmem>>, vector<1x384xf32>
    %30 = vector.broadcast %29 : vector<1x384xf32> to vector<8x384xf32>
    %31 = arith.mulf %28, %30 : vector<8x384xf32>
    %cst_17 = arith.constant dense<0.000000e+00> : vector<8xf32>
    %32 = vector.multi_reduction <add>, %31, %cst_17 [1] : vector<8x384xf32> to vector<8xf32>
    %33 = vector.shape_cast %32 : vector<8xf32> to vector<8x1xf32>
    %c0_18 = arith.constant 0 : index
    %c0_19 = arith.constant 0 : index
    %34 = vector.load %arg8[%c0_18, %c0_19] : memref<8x128xf32, #tpu.memory_space<vmem>>, vector<8x128xf32>
    %35 = vector.broadcast %33 : vector<8x1xf32> to vector<8x128xf32>
    %36 = arith.mulf %35, %34 : vector<8x128xf32>
    %cst_20 = arith.constant dense<0.000000e+00> : vector<128xf32>
    %37 = vector.multi_reduction <add>, %36, %cst_20 [0] : vector<8x128xf32> to vector<128xf32>
    %38 = vector.shape_cast %37 : vector<128xf32> to vector<1x128xf32>
    %c0_21 = arith.constant 0 : index
    %c0_22 = arith.constant 0 : index
    %39 = vector.load %arg4[%c0_21, %c0_22] : memref<8x36xf32, #tpu.memory_space<vmem>>, vector<8x36xf32>
    %c1 = arith.constant 1 : index
    %c0_23 = arith.constant 0 : index
    %c0_24 = arith.constant 0 : index
    %40 = vector.load %arg1[%c1, %c0_23, %c0_24] : memref<2x36x512xf32, #tpu.memory_space<vmem>>, vector<1x36x512xf32>
    %41 = vector.shape_cast %40 : vector<1x36x512xf32> to vector<36x512xf32>
    %cst_25 = arith.constant dense<0.000000e+00> : vector<8x512xf32>
    %42 = tpu.matmul %39, %41, %cst_25 {dimension_numbers = #tpu.dot_dimension_numbers<[1], [0], [0], [1], [0, 0, 1, 1], [], []>} : vector<8x36xf32>, vector<36x512xf32>, vector<8x512xf32> -> vector<8x512xf32>
    %c0_26 = arith.constant 0 : index
    %c0_27 = arith.constant 0 : index
    %43 = vector.load %arg5[%c0_26, %c0_27] : memref<8x1xf32, #tpu.memory_space<vmem>>, vector<8x1xf32>
    %44 = vector.broadcast %43 : vector<8x1xf32> to vector<8x512xf32>
    %45 = arith.addf %42, %44 : vector<8x512xf32>
    %cst_28 = arith.constant 0.000000e+00 : f32
    %46 = vector.broadcast %cst_28 : f32 to vector<8x512xf32>
    %47 = arith.maximumf %45, %46 : vector<8x512xf32>
    %c0_29 = arith.constant 0 : index
    %c0_30 = arith.constant 0 : index
    %48 = vector.load %arg2[%c0_29, %c0_30] : memref<1x512xf32, #tpu.memory_space<vmem>>, vector<1x512xf32>
    %49 = vector.broadcast %48 : vector<1x512xf32> to vector<8x512xf32>
    %50 = arith.mulf %47, %49 : vector<8x512xf32>
    %51 = vector.extract_strided_slice %50 {offsets = [0, 0], sizes = [8, 384], strides = [1, 1]} : vector<8x512xf32> to vector<8x384xf32>
    %52 = vector.extract_strided_slice %50 {offsets = [0, 1], sizes = [8, 384], strides = [1, 1]} : vector<8x512xf32> to vector<8x384xf32>
    %53 = vector.extract_strided_slice %50 {offsets = [0, 2], sizes = [8, 384], strides = [1, 1]} : vector<8x512xf32> to vector<8x384xf32>
    %54 = vector.extract_strided_slice %50 {offsets = [0, 18], sizes = [8, 384], strides = [1, 1]} : vector<8x512xf32> to vector<8x384xf32>
    %55 = vector.extract_strided_slice %50 {offsets = [0, 19], sizes = [8, 384], strides = [1, 1]} : vector<8x512xf32> to vector<8x384xf32>
    %56 = vector.extract_strided_slice %50 {offsets = [0, 20], sizes = [8, 384], strides = [1, 1]} : vector<8x512xf32> to vector<8x384xf32>
    %57 = vector.extract_strided_slice %50 {offsets = [0, 36], sizes = [8, 384], strides = [1, 1]} : vector<8x512xf32> to vector<8x384xf32>
    %58 = vector.extract_strided_slice %50 {offsets = [0, 37], sizes = [8, 384], strides = [1, 1]} : vector<8x512xf32> to vector<8x384xf32>
    %59 = vector.extract_strided_slice %50 {offsets = [0, 38], sizes = [8, 384], strides = [1, 1]} : vector<8x512xf32> to vector<8x384xf32>
    %60 = tpu.concatenate %51, %52, %53, %54, %55, %56, %57, %58, %59 in 0 : vector<8x384xf32>, vector<8x384xf32>, vector<8x384xf32>, vector<8x384xf32>, vector<8x384xf32>, vector<8x384xf32>, vector<8x384xf32>, vector<8x384xf32>, vector<8x384xf32> -> vector<72x384xf32>
    %c0_31 = arith.constant 0 : index
    %c0_32 = arith.constant 0 : index
    %61 = vector.load %arg6[%c0_31, %c0_32] : memref<8x72xf32, #tpu.memory_space<vmem>>, vector<8x72xf32>
    %cst_33 = arith.constant dense<0.000000e+00> : vector<8x384xf32>
    %62 = tpu.matmul %61, %60, %cst_33 {dimension_numbers = #tpu.dot_dimension_numbers<[1], [0], [0], [1], [0, 0, 1, 1], [], []>} : vector<8x72xf32>, vector<72x384xf32>, vector<8x384xf32> -> vector<8x384xf32>
    %c0_34 = arith.constant 0 : index
    %c0_35 = arith.constant 0 : index
    %63 = vector.load %arg7[%c0_34, %c0_35] : memref<8x1xf32, #tpu.memory_space<vmem>>, vector<8x1xf32>
    %64 = vector.broadcast %63 : vector<8x1xf32> to vector<8x384xf32>
    %65 = arith.addf %62, %64 : vector<8x384xf32>
    %cst_36 = arith.constant 0.000000e+00 : f32
    %66 = vector.broadcast %cst_36 : f32 to vector<8x384xf32>
    %67 = arith.maximumf %65, %66 : vector<8x384xf32>
    %c0_37 = arith.constant 0 : index
    %c0_38 = arith.constant 0 : index
    %68 = vector.load %arg3[%c0_37, %c0_38] : memref<1x384xf32, #tpu.memory_space<vmem>>, vector<1x384xf32>
    %69 = vector.broadcast %68 : vector<1x384xf32> to vector<8x384xf32>
    %70 = arith.mulf %67, %69 : vector<8x384xf32>
    %cst_39 = arith.constant dense<0.000000e+00> : vector<8xf32>
    %71 = vector.multi_reduction <add>, %70, %cst_39 [1] : vector<8x384xf32> to vector<8xf32>
    %72 = vector.shape_cast %71 : vector<8xf32> to vector<8x1xf32>
    %c0_40 = arith.constant 0 : index
    %c0_41 = arith.constant 0 : index
    %73 = vector.load %arg8[%c0_40, %c0_41] : memref<8x128xf32, #tpu.memory_space<vmem>>, vector<8x128xf32>
    %74 = vector.broadcast %72 : vector<8x1xf32> to vector<8x128xf32>
    %75 = arith.mulf %74, %73 : vector<8x128xf32>
    %cst_42 = arith.constant dense<0.000000e+00> : vector<128xf32>
    %76 = vector.multi_reduction <add>, %75, %cst_42 [0] : vector<8x128xf32> to vector<128xf32>
    %77 = vector.shape_cast %76 : vector<128xf32> to vector<1x128xf32>
    %78 = tpu.concatenate %38, %77 in 0 : vector<1x128xf32>, vector<1x128xf32> -> vector<2x128xf32>
    %c0_43 = arith.constant 0 : index
    %c0_44 = arith.constant 0 : index
    %79 = vector.load %arg9[%c0_43, %c0_44] : memref<1x128xf32, #tpu.memory_space<vmem>>, vector<1x128xf32>
    %80 = vector.broadcast %79 : vector<1x128xf32> to vector<2x128xf32>
    %81 = arith.addf %78, %80 : vector<2x128xf32>
    %c0_45 = arith.constant 0 : index
    %c0_46 = arith.constant 0 : index
    %c0_47 = arith.constant 0 : index
    %82 = vector.load %arg10[%c0_45, %c0_46, %c0_47] : memref<2x1x128xf32, #tpu.memory_space<vmem>>, vector<2x1x128xf32>
    %83 = vector.shape_cast %82 : vector<2x1x128xf32> to vector<2x128xf32>
    %84 = vector.shape_cast %81 : vector<2x128xf32> to vector<2x1x128xf32>
    tpu.vector_store %arg10[%c0_45, %c0_46, %c0_47], %84 {strides = array<i32>} : memref<2x1x128xf32, #tpu.memory_space<vmem>>, vector<2x1x128xf32>,
    return
  }
  func.func @transform_0(%arg0: i32) -> (i32, i32, i32) {
    %c0_i32 = arith.constant 0 : i32
    %c0_i32_0 = arith.constant 0 : i32
    %c0_i32_1 = arith.constant 0 : i32
    return %arg0, %c0_i32, %c0_i32_0 : i32, i32, i32
  }
  func.func @transform_1(%arg0: i32) -> (i32, i32) {
    %c0_i32 = arith.constant 0 : i32
    %c0_i32_0 = arith.constant 0 : i32
    %c0_i32_1 = arith.constant 0 : i32
    return %c0_i32, %c0_i32_0 : i32, i32
  }
  func.func @transform_2(%arg0: i32) -> (i32, i32) {
    %c0_i32 = arith.constant 0 : i32
    %c0_i32_0 = arith.constant 0 : i32
    %c0_i32_1 = arith.constant 0 : i32
    return %c0_i32, %c0_i32_0 : i32, i32
  }
  func.func @transform_3(%arg0: i32) -> (i32, i32) {
    %c0_i32 = arith.constant 0 : i32
    %c0_i32_0 = arith.constant 0 : i32
    %c0_i32_1 = arith.constant 0 : i32
    return %c0_i32, %c0_i32_0 : i32, i32
  }
  func.func @transform_4(%arg0: i32) -> (i32, i32) {
    %c0_i32 = arith.constant 0 : i32
    %c0_i32_0 = arith.constant 0 : i32
    %c0_i32_1 = arith.constant 0 : i32
    return %c0_i32, %c0_i32_0 : i32, i32
  }
  func.func @transform_5(%arg0: i32) -> (i32, i32) {
    %c0_i32 = arith.constant 0 : i32
    %c0_i32_0 = arith.constant 0 : i32
    %c0_i32_1 = arith.constant 0 : i32
    return %c0_i32, %c0_i32_0 : i32, i32
  }
  func.func @transform_6(%arg0: i32) -> (i32, i32) {
    %c0_i32 = arith.constant 0 : i32
    %c0_i32_0 = arith.constant 0 : i32
    %c0_i32_1 = arith.constant 0 : i32
    return %c0_i32, %c0_i32_0 : i32, i32
  }
  func.func @transform_7(%arg0: i32) -> (i32, i32) {
    %c0_i32 = arith.constant 0 : i32
    %c0_i32_0 = arith.constant 0 : i32
    %c0_i32_1 = arith.constant 0 : i32
    return %c0_i32, %c0_i32_0 : i32, i32
  }
  func.func @transform_8(%arg0: i32) -> (i32, i32) {
    %c0_i32 = arith.constant 0 : i32
    %c0_i32_0 = arith.constant 0 : i32
    %c0_i32_1 = arith.constant 0 : i32
    return %c0_i32, %c0_i32_0 : i32, i32
  }
  func.func @transform_9(%arg0: i32) -> (i32, i32, i32) {
    %c0_i32 = arith.constant 0 : i32
    %c0_i32_0 = arith.constant 0 : i32
    %c0_i32_1 = arith.constant 0 : i32
    return %arg0, %c0_i32, %c0_i32_0 : i32, i32, i32
  }
}

</mosaic_0001>

<llo_original>
// kernel: _lambda_.1
$region0: #{_lambda_.1}
  #allocation0 [shape = 'u32[]', space=smem, size = 0x4, offset = 0x4, fixed_abs, tag = 'smem constant byte address 0x4 - core index']
  #allocation1 [shape = 'u32[72,128]{1,0:T(1,128)}', space=vmem, size = 0x9000, scoped, tag = 'internal scratch']
  %s0 = inlined_call_operand.vmem [shape: f32[2,36,512], index: 0, kind: input, shape index: {}]
  %s1 = inlined_call_operand.vmem [shape: f32[1,512], index: 1, kind: input, shape index: {}]
  %s2 = inlined_call_operand.vmem [shape: f32[1,384], index: 2, kind: input, shape index: {}]
  %s3 = inlined_call_operand.vmem [shape: f32[8,36], index: 3, kind: input, shape index: {}]
  %s4 = inlined_call_operand.vmem [shape: f32[8,1], index: 4, kind: input, shape index: {}]
  %s5 = inlined_call_operand.vmem [shape: f32[8,72], index: 5, kind: input, shape index: {}]
  %s6 = inlined_call_operand.vmem [shape: f32[8,1], index: 6, kind: input, shape index: {}]
  %s7 = inlined_call_operand.vmem [shape: f32[8,128], index: 7, kind: input, shape index: {}]
  %s8 = inlined_call_operand.vmem [shape: f32[1,128], index: 8, kind: input, shape index: {}]
  %s9 = inlined_call_operand.vmem [shape: f32[2,1,128], index: 9, kind: output, shape index: {}]
  %s10 = sld [smem:[#allocation0]]
  $region46: #{_lambda_.1} parent=0
    _
  %s12 = ssub.s32 1, %s10
  %s13 = scalar_select 0, %s12, %s10
  // Predicated region
  $region2: #{_lambda_.1} parent=0 // pred_check
    _
  $region3: #{_lambda_.1} parent=0 // pred_check_branch
    %15 = sbr.rel (0) target = $region5
  $region4: #{_lambda_.1} parent=0 // pred_region
    _
  $region5: #{_lambda_.1} parent=0 // pred_fallthru
    _
  // Predicated region
  $region6: #{_lambda_.1} parent=0 // pred_check
    _
  $region7: #{_lambda_.1} parent=0 // pred_check_branch
    %17 = sbr.rel (0) target = $region9
  $region8: #{_lambda_.1} parent=0 // pred_region
    _
  $region9: #{_lambda_.1} parent=0 // pred_fallthru
    _
  // Predicated region
  $region10: #{_lambda_.1} parent=0 // pred_check
    _
  $region11: #{_lambda_.1} parent=0 // pred_check_branch
    %19 = sbr.rel (0) target = $region13
  $region12: #{_lambda_.1} parent=0 // pred_region
    _
  $region13: #{_lambda_.1} parent=0 // pred_fallthru
    _
  // Predicated region
  $region14: #{_lambda_.1} parent=0 // pred_check
    _
  $region15: #{_lambda_.1} parent=0 // pred_check_branch
    %21 = sbr.rel (0) target = $region17
  $region16: #{_lambda_.1} parent=0 // pred_region
    _
  $region17: #{_lambda_.1} parent=0 // pred_fallthru
    _
  // Predicated region
  $region18: #{_lambda_.1} parent=0 // pred_check
    _
  $region19: #{_lambda_.1} parent=0 // pred_check_branch
    %23 = sbr.rel (0) target = $region21
  $region20: #{_lambda_.1} parent=0 // pred_region
    _
  $region21: #{_lambda_.1} parent=0 // pred_fallthru
    _
  // Predicated region
  $region22: #{_lambda_.1} parent=0 // pred_check
    _
  $region23: #{_lambda_.1} parent=0 // pred_check_branch
    %25 = sbr.rel (0) target = $region25
  $region24: #{_lambda_.1} parent=0 // pred_region
    _
  $region25: #{_lambda_.1} parent=0 // pred_fallthru
    _
  // Predicated region
  $region26: #{_lambda_.1} parent=0 // pred_check
    _
  $region27: #{_lambda_.1} parent=0 // pred_check_branch
    %27 = sbr.rel (0) target = $region29
  $region28: #{_lambda_.1} parent=0 // pred_region
    _
  $region29: #{_lambda_.1} parent=0 // pred_fallthru
    _
  // Predicated region
  $region30: #{_lambda_.1} parent=0 // pred_check
    _
  $region31: #{_lambda_.1} parent=0 // pred_check_branch
    %29 = sbr.rel (0) target = $region33
  $region32: #{_lambda_.1} parent=0 // pred_region
    _
  $region33: #{_lambda_.1} parent=0 // pred_fallthru
    _
  // Predicated region
  $region34: #{_lambda_.1} parent=0 // pred_check
    _
  $region35: #{_lambda_.1} parent=0 // pred_check_branch
    %31 = sbr.rel (0) target = $region37
  $region36: #{_lambda_.1} parent=0 // pred_region
    _
  $region37: #{_lambda_.1} parent=0 // pred_fallthru
    _
  %v32 = vld [vmem:[%s3] sm:$0xff]
  %v33 = vld [vmem:[%s0] sm:$0xff]
  %v34 = vld [vmem:[%s0 + $0x8] sm:$0xff]
  %v35 = vld [vmem:[%s0 + $0x10] sm:$0xff]
  %v36 = vld [vmem:[%s0 + $0x18] sm:$0xff]
  %v37 = vld [vmem:[%s0 + $0x20] sm:$0xff]
  %v38 = vld [vmem:[%s0 + $0x28] sm:$0xff]
  %v39 = vld [vmem:[%s0 + $0x30] sm:$0xff]
  %v40 = vld [vmem:[%s0 + $0x38] sm:$0xff]
  %v41 = vld [vmem:[%s0 + $0x40] sm:$0xff]
  %v42 = vld [vmem:[%s0 + $0x48] sm:$0xff]
  %v43 = vld [vmem:[%s0 + $0x50] sm:$0xff]
  %v44 = vld [vmem:[%s0 + $0x58] sm:$0xff]
  %v45 = vld [vmem:[%s0 + $0x60] sm:$0xff]
  %v46 = vld [vmem:[%s0 + $0x68] sm:$0xff]
  %v47 = vld [vmem:[%s0 + $0x70] sm:$0xff]
  %v48 = vld [vmem:[%s0 + $0x78] sm:$0xff]
  %v49 = vld [vmem:[%s0 + $0x80] sm:$0xf]
  %v50 = vld [vmem:[%s0 + $0x88] sm:$0xf]
  %v51 = vld [vmem:[%s0 + $0x90] sm:$0xf]
  %v52 = vld [vmem:[%s0 + $0x98] sm:$0xf]
  %v53 = vld [vmem:[%s4] sm:$0xff]
  %55 = vset.pattern.permute.xlu0 0
  %56 = vperm.xlu0 %55, %v53
  %v57 = vpop.permute.xlu0 %56
  %vm59 = vcmask 293888
  %v61 = vsel %vm59, %v32, 0
  %vm63 = vcmask 1043456
  %v65 = vsel %vm63, %v49, 0
  %v68 = vsel %vm63, %v50, 0
  %v71 = vsel %vm63, %v51, 0
  %v74 = vsel %vm63, %v52, 0
  %76 = vmatpush.msra.mxu0 0.0
  %77 = vmatpush.msra.mxu0 0.0
  %78 = vmatpush.msra.mxu0 0.0
  %79 = vmatpush.msra.mxu0 0.0
  %80 = vmatpush.msra.mxu0 0.0
  %81 = vmatpush.msra.mxu0 0.0
  %82 = vmatpush.msra.mxu0 0.0
  %83 = vmatpush.msra.mxu0 0.0
  %84 = vmatpush.msra.mxu0 0.0
  %85 = vmatpush.msra.mxu0 0.0
  %86 = vmatpush.msra.mxu0 0.0
  %87 = vmatpush.msra.mxu0 %v65
  %88 = vmatpush.msra.mxu0 %v45
  %89 = vmatpush.msra.mxu0 %v41
  %90 = vmatpush.msra.mxu0 %v37
  %91 = vmatpush.msra.mxu0 %v33
  %92 = vmatmul.f32.gmra.mxu0 %v61
  %v93 = vpop.f32.mrf.mxu0
  %v94 = vadd.f32 %v57, %v93
  %95 = vdwg.mxu0
  %96 = vmatpush.msra.mxu0 0.0
  %97 = vmatpush.msra.mxu0 0.0
  %98 = vmatpush.msra.mxu0 0.0
  %99 = vmatpush.msra.mxu0 0.0
  %100 = vmatpush.msra.mxu0 0.0
  %101 = vmatpush.msra.mxu0 0.0
  %102 = vmatpush.msra.mxu0 0.0
  %103 = vmatpush.msra.mxu0 0.0
  %104 = vmatpush.msra.mxu0 0.0
  %105 = vmatpush.msra.mxu0 0.0
  %106 = vmatpush.msra.mxu0 0.0
  %107 = vmatpush.msra.mxu0 %v68
  %108 = vmatpush.msra.mxu0 %v46
  %109 = vmatpush.msra.mxu0 %v42
  %110 = vmatpush.msra.mxu0 %v38
  %111 = vmatpush.msra.mxu0 %v34
  %112 = vmatmul.f32.gmra.mxu0 %v61
  %v113 = vpop.f32.mrf.mxu0
  %v114 = vadd.f32 %v57, %v113
  %115 = vdwg.mxu0
  %116 = vmatpush.msra.mxu0 0.0
  %117 = vmatpush.msra.mxu0 0.0
  %118 = vmatpush.msra.mxu0 0.0
  %119 = vmatpush.msra.mxu0 0.0
  %120 = vmatpush.msra.mxu0 0.0
  %121 = vmatpush.msra.mxu0 0.0
  %122 = vmatpush.msra.mxu0 0.0
  %123 = vmatpush.msra.mxu0 0.0
  %124 = vmatpush.msra.mxu0 0.0
  %125 = vmatpush.msra.mxu0 0.0
  %126 = vmatpush.msra.mxu0 0.0
  %127 = vmatpush.msra.mxu0 %v71
  %128 = vmatpush.msra.mxu0 %v47
  %129 = vmatpush.msra.mxu0 %v43
  %130 = vmatpush.msra.mxu0 %v39
  %131 = vmatpush.msra.mxu0 %v35
  %132 = vmatmul.f32.gmra.mxu0 %v61
  %v133 = vpop.f32.mrf.mxu0
  %v134 = vadd.f32 %v57, %v133
  %135 = vdwg.mxu0
  %136 = vmatpush.msra.mxu0 0.0
  %137 = vmatpush.msra.mxu0 0.0
  %138 = vmatpush.msra.mxu0 0.0
  %139 = vmatpush.msra.mxu0 0.0
  %140 = vmatpush.msra.mxu0 0.0
  %141 = vmatpush.msra.mxu0 0.0
  %142 = vmatpush.msra.mxu0 0.0
  %143 = vmatpush.msra.mxu0 0.0
  %144 = vmatpush.msra.mxu0 0.0
  %145 = vmatpush.msra.mxu0 0.0
  %146 = vmatpush.msra.mxu0 0.0
  %147 = vmatpush.msra.mxu0 %v74
  %148 = vmatpush.msra.mxu0 %v48
  %149 = vmatpush.msra.mxu0 %v44
  %150 = vmatpush.msra.mxu0 %v40
  %151 = vmatpush.msra.mxu0 %v36
  %152 = vmatmul.f32.gmra.mxu0 %v61
  %v153 = vpop.f32.mrf.mxu0
  %v154 = vadd.f32 %v57, %v153
  %155 = vdwg.mxu0
  %v156 = vmax.f32 %v94, 0.0
  %v157 = vmax.f32 %v114, 0.0
  %v158 = vmax.f32 %v134, 0.0
  %v159 = vmax.f32 %v154, 0.0
  %v160 = vld [vmem:[%s1] sm:$0xf]
  %v162 = vperm.slane %v160, 0
  %v163 = vperm.slane %v160, 1
  %v164 = vperm.slane %v160, 2
  %v165 = vperm.slane %v160, 3
  %v170 = vmul.f32 %v156, %v162
  %v171 = vmul.f32 %v157, %v163
  %v172 = vmul.f32 %v158, %v164
  %v173 = vmul.f32 %v159, %v165
  %178 = vrot.lane.b32.xlu0 %v170, 127
  %v179 = vpop.permute.xlu0 %178
  %180 = vrot.lane.b32.xlu0 %v171, 127
  %v181 = vpop.permute.xlu0 %180
  %182 = vrot.lane.b32.xlu0 %v172, 127
  %v183 = vpop.permute.xlu0 %182
  %184 = vrot.lane.b32.xlu0 %v173, 127
  %v185 = vpop.permute.xlu0 %184
  %vm186 = vcmask 1039360
  %v187 = vsel %vm186, %v179, %v181
  %v188 = vsel %vm186, %v181, %v183
  %v189 = vsel %vm186, %v183, %v185
  %193 = vrot.lane.b32.xlu0 %v170, 126
  %v194 = vpop.permute.xlu0 %193
  %195 = vrot.lane.b32.xlu0 %v171, 126
  %v196 = vpop.permute.xlu0 %195
  %197 = vrot.lane.b32.xlu0 %v172, 126
  %v198 = vpop.permute.xlu0 %197
  %199 = vrot.lane.b32.xlu0 %v173, 126
  %v200 = vpop.permute.xlu0 %199
  %vm201 = vcmask 1031168
  %v202 = vsel %vm201, %v194, %v196
  %v203 = vsel %vm201, %v196, %v198
  %v204 = vsel %vm201, %v198, %v200
  %208 = vrot.lane.b32.xlu0 %v170, 110
  %v209 = vpop.permute.xlu0 %208
  %210 = vrot.lane.b32.xlu0 %v171, 110
  %v211 = vpop.permute.xlu0 %210
  %212 = vrot.lane.b32.xlu0 %v172, 110
  %v213 = vpop.permute.xlu0 %212
  %214 = vrot.lane.b32.xlu0 %v173, 110
  %v215 = vpop.permute.xlu0 %214
  %vm216 = vcmask 900096
  %v217 = vsel %vm216, %v209, %v211
  %v218 = vsel %vm216, %v211, %v213
  %v219 = vsel %vm216, %v213, %v215
  %223 = vrot.lane.b32.xlu0 %v170, 109
  %v224 = vpop.permute.xlu0 %223
  %225 = vrot.lane.b32.xlu0 %v171, 109
  %v226 = vpop.permute.xlu0 %225
  %227 = vrot.lane.b32.xlu0 %v172, 109
  %v228 = vpop.permute.xlu0 %227
  %229 = vrot.lane.b32.xlu0 %v173, 109
  %v230 = vpop.permute.xlu0 %229
  %vm231 = vcmask 891904
  %v232 = vsel %vm231, %v224, %v226
  %v233 = vsel %vm231, %v226, %v228
  %v234 = vsel %vm231, %v228, %v230
  %238 = vrot.lane.b32.xlu0 %v170, 108
  %v239 = vpop.permute.xlu0 %238
  %240 = vrot.lane.b32.xlu0 %v171, 108
  %v241 = vpop.permute.xlu0 %240
  %242 = vrot.lane.b32.xlu0 %v172, 108
  %v243 = vpop.permute.xlu0 %242
  %244 = vrot.lane.b32.xlu0 %v173, 108
  %v245 = vpop.permute.xlu0 %244
  %vm246 = vcmask 883712
  %v247 = vsel %vm246, %v239, %v241
  %v248 = vsel %vm246, %v241, %v243
  %v249 = vsel %vm246, %v243, %v245
  %253 = vrot.lane.b32.xlu0 %v170, 92
  %v254 = vpop.permute.xlu0 %253
  %255 = vrot.lane.b32.xlu0 %v171, 92
  %v256 = vpop.permute.xlu0 %255
  %257 = vrot.lane.b32.xlu0 %v172, 92
  %v258 = vpop.permute.xlu0 %257
  %259 = vrot.lane.b32.xlu0 %v173, 92
  %v260 = vpop.permute.xlu0 %259
  %vm261 = vcmask 752640
  %v262 = vsel %vm261, %v254, %v256
  %v263 = vsel %vm261, %v256, %v258
  %v264 = vsel %vm261, %v258, %v260
  %268 = vrot.lane.b32.xlu0 %v170, 91
  %v269 = vpop.permute.xlu0 %268
  %270 = vrot.lane.b32.xlu0 %v171, 91
  %v271 = vpop.permute.xlu0 %270
  %272 = vrot.lane.b32.xlu0 %v172, 91
  %v273 = vpop.permute.xlu0 %272
  %274 = vrot.lane.b32.xlu0 %v173, 91
  %v275 = vpop.permute.xlu0 %274
  %vm276 = vcmask 744448
  %v277 = vsel %vm276, %v269, %v271
  %v278 = vsel %vm276, %v271, %v273
  %v279 = vsel %vm276, %v273, %v275
  %283 = vrot.lane.b32.xlu0 %v170, 90
  %v284 = vpop.permute.xlu0 %283
  %285 = vrot.lane.b32.xlu0 %v171, 90
  %v286 = vpop.permute.xlu0 %285
  %287 = vrot.lane.b32.xlu0 %v172, 90
  %v288 = vpop.permute.xlu0 %287
  %289 = vrot.lane.b32.xlu0 %v173, 90
  %v290 = vpop.permute.xlu0 %289
  %vm291 = vcmask 736256
  %v292 = vsel %vm291, %v284, %v286
  %v293 = vsel %vm291, %v286, %v288
  %v294 = vsel %vm291, %v288, %v290
  %v298 = vld [vmem:[%s5] sm:$0xff]
  %v299 = vld [vmem:[%s6] sm:$0xff]
  %301 = vset.pattern.permute.xlu0 0
  %302 = vperm.xlu0 %301, %v299
  %v303 = vpop.permute.xlu0 %302
  %vm305 = vcmask 588800
  %v307 = vsel %vm305, %v298, 0
  %309 = vmatpush.msra.mxu0 0.0
  %310 = vmatpush.msra.mxu0 0.0
  %311 = vmatpush.msra.mxu0 0.0
  %312 = vmatpush.msra.mxu0 0.0
  %313 = vmatpush.msra.mxu0 0.0
  %314 = vmatpush.msra.mxu0 0.0
  %315 = vmatpush.msra.mxu0 0.0
  %316 = vmatpush.msra.mxu0 %v292
  %317 = vmatpush.msra.mxu0 %v277
  %318 = vmatpush.msra.mxu0 %v262
  %319 = vmatpush.msra.mxu0 %v247
  %320 = vmatpush.msra.mxu0 %v232
  %321 = vmatpush.msra.mxu0 %v217
  %322 = vmatpush.msra.mxu0 %v202
  %323 = vmatpush.msra.mxu0 %v187
  %324 = vmatpush.msra.mxu0 %v170
  %325 = vmatmul.f32.gmra.mxu0 %v307
  %v326 = vpop.f32.mrf.mxu0
  %v327 = vadd.f32 %v303, %v326
  %328 = vdwg.mxu0
  %329 = vmatpush.msra.mxu0 0.0
  %330 = vmatpush.msra.mxu0 0.0
  %331 = vmatpush.msra.mxu0 0.0
  %332 = vmatpush.msra.mxu0 0.0
  %333 = vmatpush.msra.mxu0 0.0
  %334 = vmatpush.msra.mxu0 0.0
  %335 = vmatpush.msra.mxu0 0.0
  %336 = vmatpush.msra.mxu0 %v293
  %337 = vmatpush.msra.mxu0 %v278
  %338 = vmatpush.msra.mxu0 %v263
  %339 = vmatpush.msra.mxu0 %v248
  %340 = vmatpush.msra.mxu0 %v233
  %341 = vmatpush.msra.mxu0 %v218
  %342 = vmatpush.msra.mxu0 %v203
  %343 = vmatpush.msra.mxu0 %v188
  %344 = vmatpush.msra.mxu0 %v171
  %345 = vmatmul.f32.gmra.mxu0 %v307
  %v346 = vpop.f32.mrf.mxu0
  %v347 = vadd.f32 %v303, %v346
  %348 = vdwg.mxu0
  %349 = vmatpush.msra.mxu0 0.0
  %350 = vmatpush.msra.mxu0 0.0
  %351 = vmatpush.msra.mxu0 0.0
  %352 = vmatpush.msra.mxu0 0.0
  %353 = vmatpush.msra.mxu0 0.0
  %354 = vmatpush.msra.mxu0 0.0
  %355 = vmatpush.msra.mxu0 0.0
  %356 = vmatpush.msra.mxu0 %v294
  %357 = vmatpush.msra.mxu0 %v279
  %358 = vmatpush.msra.mxu0 %v264
  %359 = vmatpush.msra.mxu0 %v249
  %360 = vmatpush.msra.mxu0 %v234
  %361 = vmatpush.msra.mxu0 %v219
  %362 = vmatpush.msra.mxu0 %v204
  %363 = vmatpush.msra.mxu0 %v189
  %364 = vmatpush.msra.mxu0 %v172
  %365 = vmatmul.f32.gmra.mxu0 %v307
  %v366 = vpop.f32.mrf.mxu0
  %v367 = vadd.f32 %v303, %v366
  %368 = vdwg.mxu0
  %v369 = vmax.f32 %v327, 0.0
  %v370 = vmax.f32 %v347, 0.0
  %v371 = vmax.f32 %v367, 0.0
  %v372 = vld [vmem:[%s2] sm:$0x7]
  %v374 = vperm.slane %v372, 0
  %v375 = vperm.slane %v372, 1
  %v376 = vperm.slane %v372, 2
  %v380 = vmul.f32 %v369, %v374
  %v381 = vmul.f32 %v370, %v375
  %v382 = vmul.f32 %v371, %v376
  %v383 = vadd.f32 %v380, %v381
  %v384 = vadd.f32 %v383, %v382
  %385 = vadd.xlane.f32.xlu0 %v384
  %v386 = vpop.xlane.xlu0 %385
  %v387 = vld [vmem:[%s7] sm:$0xff]
  %v388 = vmul.f32 %v386, %v387
  %v389 = vrot.slane %v388, 4
  %v390 = vadd.f32 %v388, %v389
  %v391 = vrot.slane %v390, 2
  %v392 = vadd.f32 %v390, %v391
  %v393 = vrot.slane %v392, 1
  %v394 = vadd.f32 %v392, %v393
  %s395 = scalar_lea.vmem %s0, 160
  %v396 = vld [vmem:[%s395] sm:$0xff]
  %v397 = vld [vmem:[%s395 + $0x8] sm:$0xff]
  %v398 = vld [vmem:[%s395 + $0x10] sm:$0xff]
  %v399 = vld [vmem:[%s395 + $0x18] sm:$0xff]
  %v400 = vld [vmem:[%s395 + $0x20] sm:$0xff]
  %v401 = vld [vmem:[%s395 + $0x28] sm:$0xff]
  %v402 = vld [vmem:[%s395 + $0x30] sm:$0xff]
  %v403 = vld [vmem:[%s395 + $0x38] sm:$0xff]
  %v404 = vld [vmem:[%s395 + $0x40] sm:$0xff]
  %v405 = vld [vmem:[%s395 + $0x48] sm:$0xff]
  %v406 = vld [vmem:[%s395 + $0x50] sm:$0xff]
  %v407 = vld [vmem:[%s395 + $0x58] sm:$0xff]
  %v408 = vld [vmem:[%s395 + $0x60] sm:$0xff]
  %v409 = vld [vmem:[%s395 + $0x68] sm:$0xff]
  %v410 = vld [vmem:[%s395 + $0x70] sm:$0xff]
  %v411 = vld [vmem:[%s395 + $0x78] sm:$0xff]
  %v412 = vld [vmem:[%s395 + $0x80] sm:$0xf]
  %v413 = vld [vmem:[%s395 + $0x88] sm:$0xf]
  %v414 = vld [vmem:[%s395 + $0x90] sm:$0xf]
  %v415 = vld [vmem:[%s395 + $0x98] sm:$0xf]
  %v417 = vsel %vm63, %v412, 0
  %v420 = vsel %vm63, %v413, 0
  %v423 = vsel %vm63, %v414, 0
  %v426 = vsel %vm63, %v415, 0
  %428 = vmatpush.msra.mxu0 0.0
  %429 = vmatpush.msra.mxu0 0.0
  %430 = vmatpush.msra.mxu0 0.0
  %431 = vmatpush.msra.mxu0 0.0
  %432 = vmatpush.msra.mxu0 0.0
  %433 = vmatpush.msra.mxu0 0.0
  %434 = vmatpush.msra.mxu0 0.0
  %435 = vmatpush.msra.mxu0 0.0
  %436 = vmatpush.msra.mxu0 0.0
  %437 = vmatpush.msra.mxu0 0.0
  %438 = vmatpush.msra.mxu0 0.0
  %439 = vmatpush.msra.mxu0 %v417
  %440 = vmatpush.msra.mxu0 %v408
  %441 = vmatpush.msra.mxu0 %v404
  %442 = vmatpush.msra.mxu0 %v400
  %443 = vmatpush.msra.mxu0 %v396
  %444 = vmatmul.f32.gmra.mxu0 %v61
  %v445 = vpop.f32.mrf.mxu0
  %v446 = vadd.f32 %v57, %v445
  %447 = vdwg.mxu0
  %448 = vmatpush.msra.mxu0 0.0
  %449 = vmatpush.msra.mxu0 0.0
  %450 = vmatpush.msra.mxu0 0.0
  %451 = vmatpush.msra.mxu0 0.0
  %452 = vmatpush.msra.mxu0 0.0
  %453 = vmatpush.msra.mxu0 0.0
  %454 = vmatpush.msra.mxu0 0.0
  %455 = vmatpush.msra.mxu0 0.0
  %456 = vmatpush.msra.mxu0 0.0
  %457 = vmatpush.msra.mxu0 0.0
  %458 = vmatpush.msra.mxu0 0.0
  %459 = vmatpush.msra.mxu0 %v420
  %460 = vmatpush.msra.mxu0 %v409
  %461 = vmatpush.msra.mxu0 %v405
  %462 = vmatpush.msra.mxu0 %v401
  %463 = vmatpush.msra.mxu0 %v397
  %464 = vmatmul.f32.gmra.mxu0 %v61
  %v465 = vpop.f32.mrf.mxu0
  %v466 = vadd.f32 %v57, %v465
  %467 = vdwg.mxu0
  %468 = vmatpush.msra.mxu0 0.0
  %469 = vmatpush.msra.mxu0 0.0
  %470 = vmatpush.msra.mxu0 0.0
  %471 = vmatpush.msra.mxu0 0.0
  %472 = vmatpush.msra.mxu0 0.0
  %473 = vmatpush.msra.mxu0 0.0
  %474 = vmatpush.msra.mxu0 0.0
  %475 = vmatpush.msra.mxu0 0.0
  %476 = vmatpush.msra.mxu0 0.0
  %477 = vmatpush.msra.mxu0 0.0
  %478 = vmatpush.msra.mxu0 0.0
  %479 = vmatpush.msra.mxu0 %v423
  %480 = vmatpush.msra.mxu0 %v410
  %481 = vmatpush.msra.mxu0 %v406
  %482 = vmatpush.msra.mxu0 %v402
  %483 = vmatpush.msra.mxu0 %v398
  %484 = vmatmul.f32.gmra.mxu0 %v61
  %v485 = vpop.f32.mrf.mxu0
  %v486 = vadd.f32 %v57, %v485
  %487 = vdwg.mxu0
  %488 = vmatpush.msra.mxu0 0.0
  %489 = vmatpush.msra.mxu0 0.0
  %490 = vmatpush.msra.mxu0 0.0
  %491 = vmatpush.msra.mxu0 0.0
  %492 = vmatpush.msra.mxu0 0.0
  %493 = vmatpush.msra.mxu0 0.0
  %494 = vmatpush.msra.mxu0 0.0
  %495 = vmatpush.msra.mxu0 0.0
  %496 = vmatpush.msra.mxu0 0.0
  %497 = vmatpush.msra.mxu0 0.0
  %498 = vmatpush.msra.mxu0 0.0
  %499 = vmatpush.msra.mxu0 %v426
  %500 = vmatpush.msra.mxu0 %v411
  %501 = vmatpush.msra.mxu0 %v407
  %502 = vmatpush.msra.mxu0 %v403
  %503 = vmatpush.msra.mxu0 %v399
  %504 = vmatmul.f32.gmra.mxu0 %v61
  %v505 = vpop.f32.mrf.mxu0
  %v506 = vadd.f32 %v57, %v505
  %507 = vdwg.mxu0
  %v508 = vmax.f32 %v446, 0.0
  %v509 = vmax.f32 %v466, 0.0
  %v510 = vmax.f32 %v486, 0.0
  %v511 = vmax.f32 %v506, 0.0
  %v512 = vmul.f32 %v508, %v162
  %v513 = vmul.f32 %v509, %v163
  %v514 = vmul.f32 %v510, %v164
  %v515 = vmul.f32 %v511, %v165
  %520 = vrot.lane.b32.xlu0 %v512, 127
  %v521 = vpop.permute.xlu0 %520
  %522 = vrot.lane.b32.xlu0 %v513, 127
  %v523 = vpop.permute.xlu0 %522
  %524 = vrot.lane.b32.xlu0 %v514, 127
  %v525 = vpop.permute.xlu0 %524
  %526 = vrot.lane.b32.xlu0 %v515, 127
  %v527 = vpop.permute.xlu0 %526
  %v528 = vsel %vm186, %v521, %v523
  %v529 = vsel %vm186, %v523, %v525
  %v530 = vsel %vm186, %v525, %v527
  %534 = vrot.lane.b32.xlu0 %v512, 126
  %v535 = vpop.permute.xlu0 %534
  %536 = vrot.lane.b32.xlu0 %v513, 126
  %v537 = vpop.permute.xlu0 %536
  %538 = vrot.lane.b32.xlu0 %v514, 126
  %v539 = vpop.permute.xlu0 %538
  %540 = vrot.lane.b32.xlu0 %v515, 126
  %v541 = vpop.permute.xlu0 %540
  %v542 = vsel %vm201, %v535, %v537
  %v543 = vsel %vm201, %v537, %v539
  %v544 = vsel %vm201, %v539, %v541
  %548 = vrot.lane.b32.xlu0 %v512, 110
  %v549 = vpop.permute.xlu0 %548
  %550 = vrot.lane.b32.xlu0 %v513, 110
  %v551 = vpop.permute.xlu0 %550
  %552 = vrot.lane.b32.xlu0 %v514, 110
  %v553 = vpop.permute.xlu0 %552
  %554 = vrot.lane.b32.xlu0 %v515, 110
  %v555 = vpop.permute.xlu0 %554
  %v556 = vsel %vm216, %v549, %v551
  %v557 = vsel %vm216, %v551, %v553
  %v558 = vsel %vm216, %v553, %v555
  %562 = vrot.lane.b32.xlu0 %v512, 109
  %v563 = vpop.permute.xlu0 %562
  %564 = vrot.lane.b32.xlu0 %v513, 109
  %v565 = vpop.permute.xlu0 %564
  %566 = vrot.lane.b32.xlu0 %v514, 109
  %v567 = vpop.permute.xlu0 %566
  %568 = vrot.lane.b32.xlu0 %v515, 109
  %v569 = vpop.permute.xlu0 %568
  %v570 = vsel %vm231, %v563, %v565
  %v571 = vsel %vm231, %v565, %v567
  %v572 = vsel %vm231, %v567, %v569
  %576 = vrot.lane.b32.xlu0 %v512, 108
  %v577 = vpop.permute.xlu0 %576
  %578 = vrot.lane.b32.xlu0 %v513, 108
  %v579 = vpop.permute.xlu0 %578
  %580 = vrot.lane.b32.xlu0 %v514, 108
  %v581 = vpop.permute.xlu0 %580
  %582 = vrot.lane.b32.xlu0 %v515, 108
  %v583 = vpop.permute.xlu0 %582
  %v584 = vsel %vm246, %v577, %v579
  %v585 = vsel %vm246, %v579, %v581
  %v586 = vsel %vm246, %v581, %v583
  %590 = vrot.lane.b32.xlu0 %v512, 92
  %v591 = vpop.permute.xlu0 %590
  %592 = vrot.lane.b32.xlu0 %v513, 92
  %v593 = vpop.permute.xlu0 %592
  %594 = vrot.lane.b32.xlu0 %v514, 92
  %v595 = vpop.permute.xlu0 %594
  %596 = vrot.lane.b32.xlu0 %v515, 92
  %v597 = vpop.permute.xlu0 %596
  %v598 = vsel %vm261, %v591, %v593
  %v599 = vsel %vm261, %v593, %v595
  %v600 = vsel %vm261, %v595, %v597
  %604 = vrot.lane.b32.xlu0 %v512, 91
  %v605 = vpop.permute.xlu0 %604
  %606 = vrot.lane.b32.xlu0 %v513, 91
  %v607 = vpop.permute.xlu0 %606
  %608 = vrot.lane.b32.xlu0 %v514, 91
  %v609 = vpop.permute.xlu0 %608
  %610 = vrot.lane.b32.xlu0 %v515, 91
  %v611 = vpop.permute.xlu0 %610
  %v612 = vsel %vm276, %v605, %v607
  %v613 = vsel %vm276, %v607, %v609
  %v614 = vsel %vm276, %v609, %v611
  %618 = vrot.lane.b32.xlu0 %v512, 90
  %v619 = vpop.permute.xlu0 %618
  %620 = vrot.lane.b32.xlu0 %v513, 90
  %v621 = vpop.permute.xlu0 %620
  %622 = vrot.lane.b32.xlu0 %v514, 90
  %v623 = vpop.permute.xlu0 %622
  %624 = vrot.lane.b32.xlu0 %v515, 90
  %v625 = vpop.permute.xlu0 %624
  %v626 = vsel %vm291, %v619, %v621
  %v627 = vsel %vm291, %v621, %v623
  %v628 = vsel %vm291, %v623, %v625
  %632 = vmatpush.msra.mxu0 0.0
  %633 = vmatpush.msra.mxu0 0.0
  %634 = vmatpush.msra.mxu0 0.0
  %635 = vmatpush.msra.mxu0 0.0
  %636 = vmatpush.msra.mxu0 0.0
  %637 = vmatpush.msra.mxu0 0.0
  %638 = vmatpush.msra.mxu0 0.0
  %639 = vmatpush.msra.mxu0 %v626
  %640 = vmatpush.msra.mxu0 %v612
  %641 = vmatpush.msra.mxu0 %v598
  %642 = vmatpush.msra.mxu0 %v584
  %643 = vmatpush.msra.mxu0 %v570
  %644 = vmatpush.msra.mxu0 %v556
  %645 = vmatpush.msra.mxu0 %v542
  %646 = vmatpush.msra.mxu0 %v528
  %647 = vmatpush.msra.mxu0 %v512
  %648 = vmatmul.f32.gmra.mxu0 %v307
  %v649 = vpop.f32.mrf.mxu0
  %v650 = vadd.f32 %v303, %v649
  %651 = vdwg.mxu0
  %652 = vmatpush.msra.mxu0 0.0
  %653 = vmatpush.msra.mxu0 0.0
  %654 = vmatpush.msra.mxu0 0.0
  %655 = vmatpush.msra.mxu0 0.0
  %656 = vmatpush.msra.mxu0 0.0
  %657 = vmatpush.msra.mxu0 0.0
  %658 = vmatpush.msra.mxu0 0.0
  %659 = vmatpush.msra.mxu0 %v627
  %660 = vmatpush.msra.mxu0 %v613
  %661 = vmatpush.msra.mxu0 %v599
  %662 = vmatpush.msra.mxu0 %v585
  %663 = vmatpush.msra.mxu0 %v571
  %664 = vmatpush.msra.mxu0 %v557
  %665 = vmatpush.msra.mxu0 %v543
  %666 = vmatpush.msra.mxu0 %v529
  %667 = vmatpush.msra.mxu0 %v513
  %668 = vmatmul.f32.gmra.mxu0 %v307
  %v669 = vpop.f32.mrf.mxu0
  %v670 = vadd.f32 %v303, %v669
  %671 = vdwg.mxu0
  %672 = vmatpush.msra.mxu0 0.0
  %673 = vmatpush.msra.mxu0 0.0
  %674 = vmatpush.msra.mxu0 0.0
  %675 = vmatpush.msra.mxu0 0.0
  %676 = vmatpush.msra.mxu0 0.0
  %677 = vmatpush.msra.mxu0 0.0
  %678 = vmatpush.msra.mxu0 0.0
  %679 = vmatpush.msra.mxu0 %v628
  %680 = vmatpush.msra.mxu0 %v614
  %681 = vmatpush.msra.mxu0 %v600
  %682 = vmatpush.msra.mxu0 %v586
  %683 = vmatpush.msra.mxu0 %v572
  %684 = vmatpush.msra.mxu0 %v558
  %685 = vmatpush.msra.mxu0 %v544
  %686 = vmatpush.msra.mxu0 %v530
  %687 = vmatpush.msra.mxu0 %v514
  %688 = vmatmul.f32.gmra.mxu0 %v307
  %v689 = vpop.f32.mrf.mxu0
  %v690 = vadd.f32 %v303, %v689
  %691 = vdwg.mxu0
  %v692 = vmax.f32 %v650, 0.0
  %v693 = vmax.f32 %v670, 0.0
  %v694 = vmax.f32 %v690, 0.0
  %v695 = vmul.f32 %v692, %v374
  %v696 = vmul.f32 %v693, %v375
  %v697 = vmul.f32 %v694, %v376
  %v698 = vadd.f32 %v695, %v696
  %v699 = vadd.f32 %v698, %v697
  %700 = vadd.xlane.f32.xlu0 %v699
  %v701 = vpop.xlane.xlu0 %700
  %v702 = vmul.f32 %v701, %v387
  %v703 = vrot.slane %v702, 4
  %v704 = vadd.f32 %v702, %v703
  %v705 = vrot.slane %v704, 2
  %v706 = vadd.f32 %v704, %v705
  %v707 = vrot.slane %v706, 1
  %v708 = vadd.f32 %v706, %v707
  %vm709 = vcmask 1040384
  %v710 = vsel %vm709, %v394, %v708
  %v711 = vld [vmem:[%s8] sm:$0x1]
  %v713 = vperm.slane %v711, 0
  %v715 = vadd.f32 %v710, %v713
  %v717 = vrot.slane %v715, 1
  %719 = vst [vmem:[%s9] sm:$0x1] %v715
  %720 = vst [vmem:[%s9 + $0x1] sm:$0x1] %v717
  // Predicated region
  $region38: #{_lambda_.1} parent=0 // pred_check
    _
  $region39: #{_lambda_.1} parent=0 // pred_check_branch
    %722 = sbr.rel (0) target = $region41
  $region40: #{_lambda_.1} parent=0 // pred_region
    _
  $region41: #{_lambda_.1} parent=0 // pred_fallthru
    _
  // Predicated region
  $region42: #{_lambda_.1} parent=0 // pred_check
    _
  $region43: #{_lambda_.1} parent=0 // pred_check_branch
    %724 = sbr.rel (0) target = $region45
  $region44: #{_lambda_.1} parent=0 // pred_region
    _
  $region45: #{_lambda_.1} parent=0 // pred_fallthru
    _

</llo_original>
